<compile_context>
chip_gen: v6e
topology: v6e:2x2x1
jax: 0.10.0
libtpu: 0.0.40
codegen_flags: <defaults>
</compile_context>

<pallas_src>
import functools

import jax
import jax.numpy as jnp
from jax.experimental import pallas as pl
from jax.experimental.pallas import tpu as pltpu


_LANE = 128
_SUBLANE = 8
_SMALL_INPUT_BYTES = 2 * 1024 * 1024        # below this, fused XLA mean wins
_DEFAULT_VMEM_BUDGET = 24 * 1024 * 1024     # working-set target; safe on v7x (64 MiB VMEM)
_DEFAULT_VMEM_LIMIT = 48 * 1024 * 1024


def _cdiv(a, b):
    return -(-a // b)


def _round_up(a, b):
    return _cdiv(a, b) * b


def _vmem_budget_and_limit():
    """Per-generation working-set budget / scoped-VMEM limit."""
    budget, limit = _DEFAULT_VMEM_BUDGET, _DEFAULT_VMEM_LIMIT
    try:
        cap = int(pltpu.get_tpu_info().vmem_capacity_bytes)
        if cap >= (128 << 20):               # v5e / v6e: 128 MiB physical VMEM
            budget, limit = 40 << 20, 64 << 20
    except Exception:
        pass                                 # v7x-safe defaults (24 / 48 MiB)
    return budget, limit


def _choose_tiles(T, M, itemsize, vmem_budget):
    """Pick (t_tile, m_tile) for a [T, M] input.

    t_tile is a packed-sublane multiple (or full T); m_tile is a multiple of 128
    (or full M when M <= 128). Blocks grow toward `vmem_budget`, preferring a
    wide lane dimension (long contiguous DMA runs) and growing t_tile when M is
    small so blocks stay large enough to amortize per-grid-step overhead.
    """
    sub = max(_SUBLANE, 32 // itemsize)      # 8 f32, 16 bf16, 32 int8/fp8
    t0 = T if T < sub else sub               # minimal time depth of a block

    # --- lane (M) tile --------------------------------------------------------
    if M <= _LANE:
        m_tile = M                           # full extent (no lane raggedness)
    else:
        m_aligned = (M // _LANE) * _LANE
        # VMEM bytes per unit of m_tile: double-buffered input rows at minimal
        # depth + double-buffered (1, m) output padded to 8 sublanes + f32 acc.
        per_m = 2 * t0 * itemsize + 2 * _SUBLANE * itemsize + _SUBLANE * 4
        m_tile = max(_LANE, (vmem_budget // per_m) // _LANE * _LANE)
        if m_aligned >= 16 * _LANE:
            # Keep >= 2 tiles along the "parallel" axis so both v7x TCs get work.
            m_tile = min(m_tile, max(_LANE, (m_aligned // 2) // _LANE * _LANE))
        m_tile = min(m_tile, m_aligned)

    # --- time (T) tile --------------------------------------------------------
    if T <= t0:
        t_tile = T                           # full extent
    else:
        db_row = 2 * m_tile * itemsize                       # bytes per extra block row (x2 buffers)
        fixed = _SUBLANE * m_tile * (2 * itemsize + 4)        # padded output (x2) + f32 acc
        t_budget = max(sub, ((vmem_budget - fixed) // db_row) // sub * sub)
        if t_budget >= T:
            t_tile = T                       # whole reduction in one resident block
        else:
            n_t = _cdiv(T, t_budget)         # balanced split: small ragged tail
            t_tile = _round_up(_cdiv(T, n_t), sub)
    return t_tile, m_tile


def _mean_axis0_kernel(x_ref, o_ref, acc_ref, *, true_t, true_m, inv_t,
                       t_ragged, m_ragged):
    # x_ref: (t_tile, m_tile)    o_ref / acc_ref: (1, m_tile)
    s = pl.program_id(0)
    t = pl.program_id(1)
    t_tile, m_tile = x_ref.shape

    @pl.when(t == 0)
    def _init():
        acc_ref[...] = jnp.zeros_like(acc_ref)

    def _accumulate_plain():
        acc_ref[...] += jnp.sum(x_ref[...].astype(jnp.float32), axis=0,
                                keepdims=True)

    if not (t_ragged or m_ragged):
        # Every block is fully in-bounds: pure load + add.
        _accumulate_plain()
    else:
        conds = []
        if t_ragged:
            conds.append(t == pl.num_programs(1) - 1)
        if m_ragged:
            conds.append(s == pl.num_programs(0) - 1)
        edge = conds[0] if len(conds) == 1 else jnp.logical_or(conds[0], conds[1])

        @pl.when(jnp.logical_not(edge))
        def _interior():
            _accumulate_plain()

        @pl.when(edge)
        def _masked_edge():
            # Out-of-bounds rows/lanes of an edge block hold garbage; mask them
            # to zero before they enter the sum.
            x = x_ref[...].astype(jnp.float32)
            mask = None
            if t_ragged:
                rows = jax.lax.broadcasted_iota(jnp.int32, (t_tile, m_tile), 0)
                mask = rows < (true_t - t * t_tile)
            if m_ragged:
                cols = jax.lax.broadcasted_iota(jnp.int32, (t_tile, m_tile), 1)
                cmask = cols < (true_m - s * m_tile)
                mask = cmask if mask is None else jnp.logical_and(mask, cmask)
            x = jnp.where(mask, x, 0.0)
            acc_ref[...] += jnp.sum(x, axis=0, keepdims=True)

    @pl.when(t == pl.num_programs(1) - 1)
    def _finalize():
        o_ref[...] = (acc_ref[...] * inv_t).astype(o_ref.dtype)


def _mean_axis0_pallas(x4d, vmem_budget=None):
    """Mean over axis 0 of a 4D array [T, C, H, W] -> [C, H, W] via Pallas."""
    T, C, H, W = x4d.shape
    M = C * H * W
    itemsize = jnp.dtype(x4d.dtype).itemsize

    budget, vmem_limit = _vmem_budget_and_limit()
    if vmem_budget is None:
        vmem_budget = budget

    t_tile, m_tile = _choose_tiles(T, M, itemsize, vmem_budget)
    grid = (_cdiv(M, m_tile), _cdiv(T, t_tile))     # reduction (T) axis last
    t_ragged = (T % t_tile) != 0
    m_ragged = (M % m_tile) != 0

    x2d = x4d.reshape(T, M)                          # free reshape, no copy/pad

    kernel = functools.partial(
        _mean_axis0_kernel,
        true_t=T, true_m=M, inv_t=1.0 / float(T),
        t_ragged=t_ragged, m_ragged=m_ragged)

    out2d = pl.pallas_call(
        kernel,
        out_shape=jax.ShapeDtypeStruct((1, M), x4d.dtype),
        grid_spec=pltpu.PrefetchScalarGridSpec(
            num_scalar_prefetch=0,
            grid=grid,
            in_specs=[
                pl.BlockSpec((t_tile, m_tile), lambda s, t: (t, s)),
            ],
            out_specs=pl.BlockSpec((1, m_tile), lambda s, t: (0, s)),
            scratch_shapes=[pltpu.VMEM((1, m_tile), jnp.float32)],
        ),
        compiler_params=pltpu.CompilerParams(
            dimension_semantics=("parallel", "arbitrary"),
            vmem_limit_bytes=vmem_limit,
        ),
    )(x2d)

    return out2d.reshape(C, H, W)


def spike_module_forward(x, spiking=False, min_pallas_bytes=_SMALL_INPUT_BYTES):
    """JAX/Pallas equivalent of SpikeModule.forward."""
    if (not spiking) and x.ndim == 4:
        nbytes = x.size * jnp.dtype(x.dtype).itemsize
        if nbytes < min_pallas_bytes:
            # Pure streaming mean: fused XLA reduction is already at the HBM
            # roofline and skips the custom-call launch for small inputs.
            return jnp.mean(x, axis=0).astype(x.dtype)
        return _mean_axis0_pallas(x)
    # Pass-through path (identity): no compute, no kernel needed.
    return x


if __name__ == "__main__":
    key = jax.random.PRNGKey(0)
    k1, k2, k3, k4 = jax.random.split(key, 4)

    # --- Test 1: small NCHW input, M divisible by 128 (single block) ---------
    x1 = jax.random.normal(k1, (2, 4, 16, 16), dtype=jnp.float32)
    out1 = jax.block_until_ready(_mean_axis0_pallas(x1))
    ref1 = jnp.mean(x1, axis=0)
    assert out1.shape == (4, 16, 16), out1.shape
    assert jnp.allclose(out1, ref1, atol=1e-5, rtol=1e-5)

    # --- Test 2: M < 128 -> full-extent lane dim, no padding anywhere --------
    x2 = jax.random.normal(k2, (3, 3, 7, 5), dtype=jnp.float32)
    out2 = jax.block_until_ready(_mean_axis0_pallas(x2))
    ref2 = jnp.mean(x2, axis=0)
    assert out2.shape == (3, 7, 5), out2.shape
    assert jnp.allclose(out2, ref2, atol=1e-5, rtol=1e-5)

    # --- Test 3: force a multi-block grid with ragged T AND ragged M ---------
    # (tiny vmem_budget -> t_tile=8, m_tile=128; T=20, M=390 -> masked edges)
    x3 = jax.random.normal(k3, (20, 3, 10, 13), dtype=jnp.float32)
    out3 = jax.block_until_ready(_mean_axis0_pallas(x3, vmem_budget=8192))
    ref3 = jnp.mean(x3, axis=0)
    assert out3.shape == (3, 10, 13), out3.shape
    assert jnp.allclose(out3, ref3, atol=1e-5, rtol=1e-5)

    # --- Test 4: bf16 input (packed sublane multiple = 16) with ragged edges -
    x4 = jax.random.normal(k4, (40, 2, 9, 17), dtype=jnp.float32).astype(jnp.bfloat16)
    out4 = jax.block_until_ready(_mean_axis0_pallas(x4, vmem_budget=8192))
    ref4 = jnp.mean(x4.astype(jnp.float32), axis=0).astype(jnp.bfloat16)
    assert out4.shape == (2, 9, 17), out4.shape
    assert out4.dtype == jnp.bfloat16
    assert jnp.allclose(out4.astype(jnp.float32), ref4.astype(jnp.float32),
                        atol=2e-2, rtol=2e-2)

    # --- Test 5: public wrapper (fast path, spiking pass-through, non-4D) ----
    out5 = jax.block_until_ready(spike_module_forward(x1, spiking=False))
    assert out5.shape == (4, 16, 16)
    assert jnp.allclose(out5, ref1, atol=1e-5, rtol=1e-5)

    out6 = jax.block_until_ready(spike_module_forward(x1, spiking=True))
    assert out6.shape == x1.shape and jnp.array_equal(out6, x1)

    x_3d = jax.random.normal(key, (4, 16, 32), dtype=jnp.float32)
    out7 = spike_module_forward(x_3d, spiking=False)   # non-4D -> identity
    assert out7.shape == x_3d.shape and jnp.array_equal(out7, x_3d)

    print("KERNEL_OK")
</pallas_src>

<mosaic_0001>
module attributes {stable_mosaic.version = 11 : i64} {
  func.func @_mean_axis0_kernel(%arg0: i32, %arg1: i32, %arg2: memref<2x1024xf32, #tpu.memory_space<vmem>>, %arg3: memref<1x1024xf32, #tpu.memory_space<vmem>>, %arg4: memref<1x1024xf32, #tpu.memory_space<vmem>>) attributes {dimension_semantics = [#tpu.dimension_semantics<parallel>, #tpu.dimension_semantics<arbitrary>], iteration_bounds = array<i64: 1, 1>, scalar_prefetch = 0 : i64, scratch_operands = 1 : i64, tpu.core_type = #tpu.core_type<tc>, window_params = [{transform_indices = @transform_0, window_bounds = array<i64: 2, 1024>}, {transform_indices = @transform_1, window_bounds = array<i64: 1, 1024>}]} {
    %c0_i32 = arith.constant 0 : i32
    %0 = arith.cmpi eq, %arg1, %c0_i32 : i32
    %1 = arith.extui %0 : i1 to i32
    %c0_i32_0 = arith.constant 0 : i32
    %2 = arith.cmpi ne, %1, %c0_i32_0 : i32
    scf.if %2 {
      %cst_8 = arith.constant 0.000000e+00 : f32
      %12 = vector.broadcast %cst_8 : f32 to vector<1x1024xf32>
      %c0_9 = arith.constant 0 : index
      %c0_10 = arith.constant 0 : index
      %13 = vector.load %arg4[%c0_9, %c0_10] : memref<1x1024xf32, #tpu.memory_space<vmem>>, vector<1x1024xf32>
      tpu.vector_store %arg4[%c0_9, %c0_10], %12 {strides = array<i32>} : memref<1x1024xf32, #tpu.memory_space<vmem>>, vector<1x1024xf32>,
    } else {
    }
    %c0 = arith.constant 0 : index
    %c0_1 = arith.constant 0 : index
    %3 = vector.load %arg4[%c0, %c0_1] : memref<1x1024xf32, #tpu.memory_space<vmem>>, vector<1x1024xf32>
    %c0_2 = arith.constant 0 : index
    %c0_3 = arith.constant 0 : index
    %4 = vector.load %arg2[%c0_2, %c0_3] : memref<2x1024xf32, #tpu.memory_space<vmem>>, vector<2x1024xf32>
    %cst = arith.constant dense<0.000000e+00> : vector<1024xf32>
    %5 = vector.multi_reduction <add>, %4, %cst [0] : vector<2x1024xf32> to vector<1024xf32>
    %6 = vector.shape_cast %5 : vector<1024xf32> to vector<1x1024xf32>
    %7 = arith.addf %3, %6 : vector<1x1024xf32>
    %c0_4 = arith.constant 0 : index
    %c0_5 = arith.constant 0 : index
    %8 = vector.load %arg4[%c0_4, %c0_5] : memref<1x1024xf32, #tpu.memory_space<vmem>>, vector<1x1024xf32>
    tpu.vector_store %arg4[%c0_4, %c0_5], %7 {strides = array<i32>} : memref<1x1024xf32, #tpu.memory_space<vmem>>, vector<1x1024xf32>,
    %c0_i32_6 = arith.constant 0 : i32
    %9 = arith.cmpi eq, %arg1, %c0_i32_6 : i32
    %10 = arith.extui %9 : i1 to i32
    %c0_i32_7 = arith.constant 0 : i32
    %11 = arith.cmpi ne, %10, %c0_i32_7 : i32
    scf.if %11 {
      %c0_8 = arith.constant 0 : index
      %c0_9 = arith.constant 0 : index
      %12 = vector.load %arg4[%c0_8, %c0_9] : memref<1x1024xf32, #tpu.memory_space<vmem>>, vector<1x1024xf32>
      %cst_10 = arith.constant 5.000000e-01 : f32
      %13 = vector.broadcast %cst_10 : f32 to vector<1x1024xf32>
      %14 = arith.mulf %12, %13 : vector<1x1024xf32>
      %c0_11 = arith.constant 0 : index
      %c0_12 = arith.constant 0 : index
      %15 = vector.load %arg3[%c0_11, %c0_12] : memref<1x1024xf32, #tpu.memory_space<vmem>>, vector<1x1024xf32>
      tpu.vector_store %arg3[%c0_11, %c0_12], %14 {strides = array<i32>} : memref<1x1024xf32, #tpu.memory_space<vmem>>, vector<1x1024xf32>,
    } else {
    }
    return
  }
  func.func @transform_0(%arg0: i32, %arg1: i32) -> (i32, i32) {
    %c0_i32 = arith.constant 0 : i32
    return %arg1, %arg0 : i32, i32
  }
  func.func @transform_1(%arg0: i32, %arg1: i32) -> (i32, i32) {
    %c0_i32 = arith.constant 0 : i32
    %c0_i32_0 = arith.constant 0 : i32
    return %c0_i32, %arg0 : i32, i32
  }
}

</mosaic_0001>

<llo_original>
// kernel: tpu_custom_call.1
$region0: #{tpu_custom_call.1}
  #allocation0 [shape = 'u32[]', space=smem, size = 0x4, offset = 0x4, fixed_abs, tag = 'smem constant byte address 0x4 - core index']
  #allocation1 [shape = 'u32[144,128]{1,0:T(1,128)}', space=vmem, size = 0x12000, scoped, tag = 'internal scratch']
  #allocation2 [shape = 'f32[1,1024]{1,0:T(1,128)}', space=vmem, size = 0x1000, scoped, tag = 'scratch operand']
  %s0 = inlined_call_operand.hbm [shape: f32[2,1024], index: 0, kind: input, shape index: {}]
  %s1 = inlined_call_operand.hbm [shape: f32[1,1024], index: 1, kind: output, shape index: {}]
  %s2 = sld [smem:[#allocation0]]
  $region26: #{tpu_custom_call.1} parent=0
    _
  %s4 = ssub.s32 1, %s2
  %s5 = scalar_select 0, %s4, %s2
  $region1: #{tpu_custom_call.1} parent=0
    #allocation3 [shape = 'u8[8192]{0}', space=vmem, size = 0x2000, scoped, tag = 'input window, operand 0, single buffered']
    #allocation4 [shape = 's32[1]{0}', space=sflag, size = 0x4, scoped, tag = 'scoped memory for tpu_custom_call.1']
    #allocation5 [shape = 's32[1]{0}', space=sflag, size = 0x4, scoped, tag = 'scoped memory for tpu_custom_call.1']
    #allocation6 [shape = 'u8[4096]{0}', space=vmem, size = 0x1000, scoped, tag = 'output window, operand 0, single buffered']
    %6 = vsyncpa [#allocation4], 0
    %7 = vsyncpa [#allocation5], 0
    // Predicated region
    $region2: #{tpu_custom_call.1} parent=1 // pred_check
      _
    $region3: #{tpu_custom_call.1} parent=1 // pred_check_branch
      %9 = sbr.rel (0) target = $region5
    $region4: #{tpu_custom_call.1} parent=1 // pred_region
      %s11 = ssub.s32 256, 256
      %12 = vsyncadd [#allocation4], %s11
      %s14 = sshll.u32 [#allocation3], 4
      %s15 = int_to_ptr.vmem [resolvable:$true] %s14
      %17 = dma.hbm_to_vmem [thread:$0]  %s0, 256, %s15, [#allocation4]
    $region5: #{tpu_custom_call.1} parent=1 // pred_fallthru
      _
    // Predicated region
    $region6: #{tpu_custom_call.1} parent=1 // pred_check
      _
    $region7: #{tpu_custom_call.1} parent=1 // pred_check_branch
      %19 = sbr.rel (0) target = $region9
    $region8: #{tpu_custom_call.1} parent=1 // pred_region
      %20 = dma.done [#allocation4], 256
    $region9: #{tpu_custom_call.1} parent=1 // pred_fallthru
      _
    %p21 = scmp.eq.s32.totalorder 0, 0
    // Predicated region
    $region10: #{tpu_custom_call.1} parent=1 // pred_check
      %p22 = pneg %p21
    $region11: #{tpu_custom_call.1} parent=1 // pred_check_branch
      %24 = sbr.rel (%p22) target = $region13
    $region12: #{tpu_custom_call.1} parent=1 // pred_region
      %25 = vst [vmem:[#allocation2] sm:$0xff] 0.0
    $region13: #{tpu_custom_call.1} parent=1 // pred_fallthru
      _
    %v26 = vld [vmem:[#allocation2] sm:$0xff]
    %v27 = vld [vmem:[#allocation3] sm:$0xff]
    %v28 = vld [vmem:[#allocation3 + $0x8] sm:$0xff]
    %v31 = vcombine.high %v27, %v27
    %v33 = vunpack.c.l.s4 1983009808
    %v34 = vunpack.c.0.s8 %v33
    %v35 = vlaneseq
    %v36 = vshrl.u32 %v35, 7
    %v37 = vsub.s32 %v34, %v36
    %v38 = vrot.slane %v27, %v37
    %v40 = vunpack.c.l.s4 1983009808
    %v41 = vunpack.c.0.s8 %v40
    %v42 = vlaneseq
    %v43 = vshrl.u32 %v42, 7
    %v44 = vsub.s32 %v41, %v43
    %v45 = vrot.slane %v31, %v44
    %v46 = vcombine.high %v38, %v38
    %v47 = vcombine.high %v45, %v45
    %v48 = vcombine.high %v28, %v28
    %v50 = vunpack.c.l.s4 1983009808
    %v51 = vunpack.c.0.s8 %v50
    %v52 = vlaneseq
    %v53 = vshrl.u32 %v52, 7
    %v54 = vsub.s32 %v51, %v53
    %v55 = vrot.slane %v28, %v54
    %v57 = vunpack.c.l.s4 1983009808
    %v58 = vunpack.c.0.s8 %v57
    %v59 = vlaneseq
    %v60 = vshrl.u32 %v59, 7
    %v61 = vsub.s32 %v58, %v60
    %v62 = vrot.slane %v48, %v61
    %v63 = vcombine.high %v55, %v55
    %v64 = vcombine.high %v62, %v62
    %vm73 = vcmask 1041408
    %v74 = vsel %vm73, %v38, 0.0
    %v75 = vrot.slane %v74, 4
    %v76 = vadd.f32 %v74, %v75
    %v77 = vrot.slane %v76, 2
    %v78 = vadd.f32 %v76, %v77
    %v79 = vrot.slane %v78, 1
    %v80 = vadd.f32 %v78, %v79
    %v81 = vsel %vm73, %v46, 0.0
    %v82 = vrot.slane %v81, 4
    %v83 = vadd.f32 %v81, %v82
    %v84 = vrot.slane %v83, 2
    %v85 = vadd.f32 %v83, %v84
    %v86 = vrot.slane %v85, 1
    %v87 = vadd.f32 %v85, %v86
    %v88 = vsel %vm73, %v45, 0.0
    %v89 = vrot.slane %v88, 4
    %v90 = vadd.f32 %v88, %v89
    %v91 = vrot.slane %v90, 2
    %v92 = vadd.f32 %v90, %v91
    %v93 = vrot.slane %v92, 1
    %v94 = vadd.f32 %v92, %v93
    %v95 = vsel %vm73, %v47, 0.0
    %v96 = vrot.slane %v95, 4
    %v97 = vadd.f32 %v95, %v96
    %v98 = vrot.slane %v97, 2
    %v99 = vadd.f32 %v97, %v98
    %v100 = vrot.slane %v99, 1
    %v101 = vadd.f32 %v99, %v100
    %v102 = vsel %vm73, %v55, 0.0
    %v103 = vrot.slane %v102, 4
    %v104 = vadd.f32 %v102, %v103
    %v105 = vrot.slane %v104, 2
    %v106 = vadd.f32 %v104, %v105
    %v107 = vrot.slane %v106, 1
    %v108 = vadd.f32 %v106, %v107
    %v109 = vsel %vm73, %v63, 0.0
    %v110 = vrot.slane %v109, 4
    %v111 = vadd.f32 %v109, %v110
    %v112 = vrot.slane %v111, 2
    %v113 = vadd.f32 %v111, %v112
    %v114 = vrot.slane %v113, 1
    %v115 = vadd.f32 %v113, %v114
    %v116 = vsel %vm73, %v62, 0.0
    %v117 = vrot.slane %v116, 4
    %v118 = vadd.f32 %v116, %v117
    %v119 = vrot.slane %v118, 2
    %v120 = vadd.f32 %v118, %v119
    %v121 = vrot.slane %v120, 1
    %v122 = vadd.f32 %v120, %v121
    %v123 = vsel %vm73, %v64, 0.0
    %v124 = vrot.slane %v123, 4
    %v125 = vadd.f32 %v123, %v124
    %v126 = vrot.slane %v125, 2
    %v127 = vadd.f32 %v125, %v126
    %v128 = vrot.slane %v127, 1
    %v129 = vadd.f32 %v127, %v128
    %v138 = vcombine.low %v80, %v87
    %v139 = vcombine.low %v94, %v101
    %v140 = vcombine.low %v108, %v115
    %v141 = vcombine.low %v122, %v129
    %v143 = vunpack.c.l.s4 1966171168
    %v144 = vunpack.c.0.s8 %v143
    %v145 = vlaneseq
    %v146 = vshrl.u32 %v145, 7
    %v147 = vsub.s32 %v144, %v146
    %v148 = vrot.slane %v138, %v147
    %v150 = vunpack.c.l.s4 1966171168
    %v151 = vunpack.c.0.s8 %v150
    %v152 = vlaneseq
    %v153 = vshrl.u32 %v152, 7
    %v154 = vsub.s32 %v151, %v153
    %v155 = vrot.slane %v139, %v154
    %v157 = vunpack.c.l.s4 1966171168
    %v158 = vunpack.c.0.s8 %v157
    %v159 = vlaneseq
    %v160 = vshrl.u32 %v159, 7
    %v161 = vsub.s32 %v158, %v160
    %v162 = vrot.slane %v140, %v161
    %v164 = vunpack.c.l.s4 1966171168
    %v165 = vunpack.c.0.s8 %v164
    %v166 = vlaneseq
    %v167 = vshrl.u32 %v166, 7
    %v168 = vsub.s32 %v165, %v167
    %v169 = vrot.slane %v141, %v168
    %v170 = vcombine.low %v148, %v155
    %v171 = vcombine.low %v162, %v169
    %v173 = vunpack.c.l.s4 1966171168
    %v174 = vunpack.c.0.s8 %v173
    %v175 = vlaneseq
    %v176 = vshrl.u32 %v175, 7
    %v177 = vsub.s32 %v174, %v176
    %v178 = vrot.slane %v170, %v177
    %v180 = vunpack.c.l.s4 1966171168
    %v181 = vunpack.c.0.s8 %v180
    %v182 = vlaneseq
    %v183 = vshrl.u32 %v182, 7
    %v184 = vsub.s32 %v181, %v183
    %v185 = vrot.slane %v171, %v184
    %v186 = vcombine.low %v178, %v185
    %v188 = vadd.f32 %v26, %v186
    %189 = vst [vmem:[#allocation2] sm:$0xff] %v188
    // Predicated region
    $region14: #{tpu_custom_call.1} parent=1 // pred_check
      %p190 = pneg %p21
    $region15: #{tpu_custom_call.1} parent=1 // pred_check_branch
      %192 = sbr.rel (%p190) target = $region17
    $region16: #{tpu_custom_call.1} parent=1 // pred_region
      %v193 = vld [vmem:[#allocation2] sm:$0xff]
      %v194 = vmul.f32 %v193, 0.5
      %195 = vst [vmem:[#allocation6] sm:$0xff] %v194
    $region17: #{tpu_custom_call.1} parent=1 // pred_fallthru
      _
    // Predicated region
    $region18: #{tpu_custom_call.1} parent=1 // pred_check
      _
    $region19: #{tpu_custom_call.1} parent=1 // pred_check_branch
      %197 = sbr.rel (0) target = $region21
    $region20: #{tpu_custom_call.1} parent=1 // pred_region
      %s199 = ssub.s32 128, 128
      %200 = vsyncadd [#allocation5], %s199
      %s202 = sshll.u32 [#allocation6], 4
      %s203 = int_to_ptr.vmem [resolvable:$true] %s202
      %205 = dma.vmem_to_hbm [thread:$0]  %s203, 128, %s1, [#allocation5]
    $region21: #{tpu_custom_call.1} parent=1 // pred_fallthru
      _
    // Predicated region
    $region22: #{tpu_custom_call.1} parent=1 // pred_check
      _
    $region23: #{tpu_custom_call.1} parent=1 // pred_check_branch
      %207 = sbr.rel (0) target = $region25
    $region24: #{tpu_custom_call.1} parent=1 // pred_region
      %208 = dma.done [#allocation5], 128
    $region25: #{tpu_custom_call.1} parent=1 // pred_fallthru
      _
    %209 = vsyncpa [#allocation4], 1
    %210 = vsyncpa [#allocation5], 1

</llo_original>
